<compile_context>
chip_gen: v7x
topology: tpu7x:2x2x1
jax: 0.10.0
libtpu: 0.0.40
codegen_flags: <defaults>
</compile_context>

<pallas_src>
import functools

import jax
import jax.numpy as jnp
from jax import lax
from jax.experimental import pallas as pl
from jax.experimental.pallas import tpu as pltpu


_VMEM_LIMIT = 40 * 1024 * 1024


def _round_up(x, m):
    return -(-x // m) * m


def _pick_c_tile(c_total, div_base, user):
    """Largest column tile (<=512) dividing div_base, keeping >=2 col tiles."""
    if user is not None:
        assert user % 128 == 0 and div_base % user == 0 and c_total % user == 0
        return user
    t = 128
    for cand in (512, 256, 128):
        if cand <= div_base and div_base % cand == 0:
            t = cand
            break
    # prefer >= 2 column tiles so the "parallel" axis can shard across both
    # TensorCores on v7x megacore parts.
    while t > 128 and c_total // t < 2:
        t //= 2
    return t


# ---------------------------------------------------------------------------
# Kernel 1: untruncated path (L == T) -- blocked 8-row EMA scan.
# ---------------------------------------------------------------------------
def _ema_scan_kernel(*refs, n_dim, group_count, has_mask):
    """Grid = (column_tiles["parallel"], time_chunks["arbitrary"]).

    refs (mask):   keep, x, cm, a, bw, q8, omega, out, h_scr
    refs (no mask):      x, cm, a, bw, q8, omega, out, h_scr

    Block shapes:
      keep : (1, gchunk, 8, 1)     per-(t,b) keep scalar
      x/out: (gchunk, 8, Ct)       time rows grouped by 8
      cm   : (8, 8, Ct)            cm[j, r, :] = (r>=j) * sum_n gamma*p*q^j
      a    : (N, 8, Ct)            a[n, r, :]  = gamma_n * q_n^(r+1)
      bw   : (N, 8, Ct)            bw[n, s, :] = p_n * q_n^(7-s)
      q8   : (N, Ct)               q_n^8
      omega: (1, Ct)
      h_scr: (N, Ct) f32 VMEM      persistent EMA state across time chunks
    """
    if has_mask:
        keep_ref, x_ref, cm_ref, a_ref, bw_ref, q8_ref, w_ref, out_ref, h_ref = refs
    else:
        x_ref, cm_ref, a_ref, bw_ref, q8_ref, w_ref, out_ref, h_ref = refs
        keep_ref = None

    # Reset the recurrence state at the first time-chunk of each column tile.
    @pl.when(pl.program_id(1) == 0)
    def _init():
        h_ref[...] = jnp.zeros_like(h_ref)

    def group_body(g, h):
        xr = x_ref[g].astype(jnp.float32)                      # (8, Ct)
        if has_mask:
            xm = xr * keep_ref[0, g].astype(jnp.float32)       # (8,1) lane bcast
        else:
            xm = xr

        # carry-in contribution:  y[r] += sum_n gamma_n q_n^(r+1) h_in[n]
        y = a_ref[0].astype(jnp.float32) * h[0]
        for n in range(1, n_dim):
            y = y + a_ref[n].astype(jnp.float32) * h[n]

        # intra-group causal taps:  y[r] += sum_{j<=r} c_j x[r-j]
        y = y + cm_ref[0].astype(jnp.float32) * xm
        for j in range(1, 8):
            y = y + cm_ref[j].astype(jnp.float32) * pltpu.roll(xm, shift=j,
                                                               axis=0)

        # fused epilogue: residual (unmasked x) + SiLU, one lane-dense store.
        z = y + xr * w_ref[...].astype(jnp.float32)
        out_ref[g] = (z * jax.nn.sigmoid(z)).astype(out_ref.dtype)

        # carry update: h_out[n] = q_n^8 h_in[n] + sum_s p_n q_n^(7-s) x[s]
        h_new = []
        for n in range(n_dim):
            red = jnp.sum(bw_ref[n].astype(jnp.float32) * xm, axis=0,
                          keepdims=True)                       # (1, Ct)
            h_new.append(q8_ref[n:n + 1, :].astype(jnp.float32) * h[n] + red)
        return tuple(h_new)

    h0 = tuple(h_ref[n:n + 1, :] for n in range(n_dim))
    unroll = 2 if group_count >= 2 else 1
    h_fin = lax.fori_loop(0, group_count, group_body, h0, unroll=unroll)
    for n in range(n_dim):
        h_ref[n:n + 1, :] = h_fin[n]                           # carry to next chunk


# ---------------------------------------------------------------------------
# Kernel 2: truncated path (L < T) -- direct L-tap causal conv, T tiled.
# ---------------------------------------------------------------------------
def _ema_trunc_kernel(*refs, kernel_len, t_tile, has_mask):
    """Grid = (column_tiles["parallel"], time_tiles["arbitrary"]).

    refs (mask):   keep, x, k, omega, out, stage
    refs (no mask):      x, k, omega, out, stage
    stage: (L-1 + t_tile, Ct) f32 VMEM; rows [0, L-1) hold the masked-x tail of
    the previous time tile (zeros for the first tile of each column).
    """
    if has_mask:
        keep_ref, x_ref, k_ref, w_ref, out_ref, stage_ref = refs
    else:
        x_ref, k_ref, w_ref, out_ref, stage_ref = refs
        keep_ref = None

    lm1 = kernel_len - 1
    ct = stage_ref.shape[1]

    if lm1 > 0:
        @pl.when(pl.program_id(1) == 0)
        def _init():
            stage_ref[0:lm1, :] = jnp.zeros((lm1, ct), jnp.float32)

    def group_body(g, carry):
        r0 = pl.multiple_of(g * 8, 8)
        xr = x_ref[pl.ds(r0, 8), :].astype(jnp.float32)        # (8, Ct)
        if has_mask:
            xm = xr * keep_ref[0, pl.ds(r0, 8), :].astype(jnp.float32)
        else:
            xm = xr
        stage_ref[pl.ds(lm1 + r0, 8), :] = xm

        # register-resident accumulation over the taps (no acc_ref RMW).
        acc = xm * k_ref[0:1, :].astype(jnp.float32)
        # TODO(synk): for very large truncation values switch this static tap
        # loop to a fori_loop to bound unrolled code size.
        for j in range(1, kernel_len):
            acc = acc + (stage_ref[pl.ds(lm1 + r0 - j, 8), :]
                         * k_ref[j:j + 1, :].astype(jnp.float32))

        z = acc + xr * w_ref[...].astype(jnp.float32)
        out_ref[pl.ds(r0, 8), :] = (z * jax.nn.sigmoid(z)).astype(out_ref.dtype)
        return carry

    n_groups = t_tile // 8
    unroll = 2 if (n_groups >= 2 and kernel_len <= 16) else 1
    lax.fori_loop(0, n_groups, group_body, 0, unroll=unroll)

    if lm1 > 0:
        # carry the last L-1 masked rows into the head for the next time tile.
        stage_ref[0:lm1, :] = stage_ref[t_tile:t_tile + lm1, :]


# ---------------------------------------------------------------------------
# Wrapper
# ---------------------------------------------------------------------------
def base_moving_layer_forward(x_tbd, p_nd, logq_nd, gamma_nd, omega_1d,
                              padding_mask=None, truncation=None,
                              *, t_chunk=None, c_tile=None):
    """x_tbd: (T, B, D); p/logq/gamma: (N, D); omega: (1, D) or (D,).
    Returns silu(EMA_conv(masked x) + x*omega), shape (T, B, D)."""
    T, B, D = x_tbd.shape
    N = p_nd.shape[0]
    dtype = x_tbd.dtype
    L = T if (truncation is None or truncation < 1) else min(truncation, T)
    has_mask = padding_mask is not None

    # ---- parameters (f32, tiny, plain JAX; transcendentals hoisted) ---------
    p = p_nd.astype(jnp.float32)
    q = jnp.exp(logq_nd.astype(jnp.float32))
    g = gamma_nd.astype(jnp.float32)
    om = omega_1d.astype(jnp.float32).reshape(1, D)

    # ---- column layout -------------------------------------------------------
    if has_mask:
        # per-batch padded layout: column = b * D_pad + d, so every column tile
        # lies inside one batch and the tiny (B, T) keep mask is applied
        # in-kernel (no duplicate full-size masked-x stream).
        D_pad = _round_up(D, 128)
        C = B * D_pad
        ctile = _pick_c_tile(C, D_pad, c_tile)
        tpb = D_pad // ctile                      # column tiles per batch

        def to_cols(arr):
            if D_pad != D:
                arr = jnp.pad(arr, [(0, 0)] * (arr.ndim - 1) + [(0, D_pad - D)])
            return jnp.tile(arr, (1,) * (arr.ndim - 1) + (B,))

        x2 = x_tbd
        if D_pad != D:
            x2 = jnp.pad(x2, ((0, 0), (0, 0), (0, D_pad - D)))
        x2 = x2.reshape(T, C)
        keep_bt = 1.0 - padding_mask.astype(jnp.float32)        # (B, T)
    else:
        # flat layout: column = b * D + d, single pad of the flattened axis.
        C = _round_up(B * D, 128)
        ctile = _pick_c_tile(C, C, c_tile)
        tpb = 1

        def to_cols(arr):
            arr = jnp.tile(arr, (1,) * (arr.ndim - 1) + (B,))
            if C != B * D:
                arr = jnp.pad(arr, [(0, 0)] * (arr.ndim - 1) + [(0, C - B * D)])
            return arr

        x2 = x_tbd.reshape(T, B * D)
        if C != B * D:
            x2 = jnp.pad(x2, ((0, 0), (0, C - B * D)))
        keep_bt = None

    n_col = C // ctile
    om_c = to_cols(om)                                           # (1, C)

    if L == T:
        # -------------------- blocked-scan recurrence path -------------------
        j9 = jnp.arange(9, dtype=jnp.float32)
        qp = q[None, :, :] ** j9[:, None, None]                  # (9, N, D)
        c8 = jnp.einsum('nd,jnd->jd', g * p, qp[:8])             # (8, D)
        tri = (jnp.arange(8)[None, :] >= jnp.arange(8)[:, None]
               ).astype(jnp.float32)                             # (j, r)
        cm = c8[:, None, :] * tri[:, :, None]                    # (8, 8, D)
        a8 = g[:, None, :] * jnp.transpose(qp[1:9], (1, 0, 2))   # (N, 8, D)
        bw = p[:, None, :] * jnp.transpose(qp[:8][::-1], (1, 0, 2))  # (N, 8, D)
        q8 = qp[8]                                               # (N, D)

        cm_c, a_c, bw_c, q8_c = to_cols(cm), to_cols(a8), to_cols(bw), to_cols(q8)

        tch = (256 if T > 256 else _round_up(T, 8)) if t_chunk is None else t_chunk
        assert tch % 8 == 0
        T_pad = _round_up(T, tch)
        gchunk = tch // 8
        n_tc = T_pad // tch

        if T_pad != T:
            x2 = jnp.pad(x2, ((0, T_pad - T), (0, 0)))
        xg = x2.reshape(T_pad // 8, 8, C)                        # free reshape

        xspec = pl.BlockSpec((gchunk, 8, ctile), lambda ci, ti: (ti, 0, ci))
        inputs = [xg]
        in_specs = [xspec]
        if has_mask:
            keep = keep_bt
            if T_pad != T:
                keep = jnp.pad(keep, ((0, 0), (0, T_pad - T)))
            keep = keep.reshape(B, T_pad // 8, 8, 1)
            inputs = [keep] + inputs
            in_specs = [pl.BlockSpec((1, gchunk, 8, 1),
                                     lambda ci, ti: (ci // tpb, ti, 0, 0))
                        ] + in_specs
        inputs += [cm_c, a_c, bw_c, q8_c, om_c]
        in_specs += [
            pl.BlockSpec((8, 8, ctile), lambda ci, ti: (0, 0, ci)),
            pl.BlockSpec((N, 8, ctile), lambda ci, ti: (0, 0, ci)),
            pl.BlockSpec((N, 8, ctile), lambda ci, ti: (0, 0, ci)),
            pl.BlockSpec((N, ctile), lambda ci, ti: (0, ci)),
            pl.BlockSpec((1, ctile), lambda ci, ti: (0, ci)),
        ]

        out2 = pl.pallas_call(
            functools.partial(_ema_scan_kernel, n_dim=N, group_count=gchunk,
                              has_mask=has_mask),
            out_shape=jax.ShapeDtypeStruct((T_pad // 8, 8, C), dtype),
            grid=(n_col, n_tc),
            in_specs=in_specs,
            out_specs=pl.BlockSpec((gchunk, 8, ctile),
                                   lambda ci, ti: (ti, 0, ci)),
            scratch_shapes=[pltpu.VMEM((N, ctile), jnp.float32)],  # EMA state
            compiler_params=pltpu.CompilerParams(
                dimension_semantics=("parallel", "arbitrary"),
                vmem_limit_bytes=_VMEM_LIMIT),
        )(*inputs)
        out2 = out2.reshape(T_pad, C)[:T]
    else:
        # -------------------- truncated direct-conv path ---------------------
        lgrid = jnp.arange(L, dtype=jnp.float32)
        vander = q[:, None, :] ** lgrid[None, :, None]           # (N, L, D)
        k_ld = jnp.einsum('nd,nld->ld', g * p, vander)           # (L, D)
        k_c = to_cols(k_ld)                                      # (L, C)

        lm1 = L - 1
        tt = (256 if T > 256 else _round_up(T, 8)) if t_chunk is None else t_chunk
        tt = max(tt, _round_up(max(lm1, 1), 8))
        assert tt % 8 == 0
        T_pad = _round_up(T, tt)
        n_tt = T_pad // tt

        if T_pad != T:
            x2 = jnp.pad(x2, ((0, T_pad - T), (0, 0)))

        xspec = pl.BlockSpec((tt, ctile), lambda ci, ti: (ti, ci))
        inputs = [x2]
        in_specs = [xspec]
        if has_mask:
            keep = keep_bt
            if T_pad != T:
                keep = jnp.pad(keep, ((0, 0), (0, T_pad - T)))
            keep = keep.reshape(B, T_pad, 1)
            inputs = [keep] + inputs
            in_specs = [pl.BlockSpec((1, tt, 1),
                                     lambda ci, ti: (ci // tpb, ti, 0))
                        ] + in_specs
        inputs += [k_c, om_c]
        in_specs += [pl.BlockSpec((L, ctile), lambda ci, ti: (0, ci)),
                     pl.BlockSpec((1, ctile), lambda ci, ti: (0, ci))]

        out2 = pl.pallas_call(
            functools.partial(_ema_trunc_kernel, kernel_len=L, t_tile=tt,
                              has_mask=has_mask),
            out_shape=jax.ShapeDtypeStruct((T_pad, C), dtype),
            grid=(n_col, n_tt),
            in_specs=in_specs,
            out_specs=pl.BlockSpec((tt, ctile), lambda ci, ti: (ti, ci)),
            scratch_shapes=[pltpu.VMEM((lm1 + tt, ctile), jnp.float32)],
            compiler_params=pltpu.CompilerParams(
                dimension_semantics=("parallel", "arbitrary"),
                vmem_limit_bytes=_VMEM_LIMIT),
        )(*inputs)
        out2 = out2[:T]

    if has_mask:
        out = out2.reshape(T, B, D_pad)
        if D_pad != D:
            out = out[:, :, :D]
    else:
        out = out2[:, :B * D].reshape(T, B, D)
    return out

    # TODO(synk): incremental_state decode path (step/one_step) and the
    # bidirectional kernel-padding branch are not implemented (base __init__
    # sets bidirectional=False; forward() here covers incremental_state=None).


# ---------------------------------------------------------------------------
# Pure-JAX mirror of the torch code (rfft/irfft, like PyTorch).
# ---------------------------------------------------------------------------
def reference_forward(x_tbd, p_nd, logq_nd, gamma_nd, omega_1d,
                      padding_mask=None, truncation=None):
    T, B, D = x_tbd.shape
    L = T if (truncation is None or truncation < 1) else min(truncation, T)
    residual = x_tbd * omega_1d[0]                              # (T, B, D)
    x_bdt = jnp.transpose(x_tbd, (1, 2, 0))                     # (B, D, T)
    if padding_mask is not None:
        x_bdt = x_bdt * (1.0 - padding_mask[:, None, :].astype(x_bdt.dtype))
    l = jnp.arange(L, dtype=jnp.float32)
    vander = jnp.exp(logq_nd[:, :, None] * l[None, None, :])    # (N, D, L)
    k = jnp.einsum('nd,ndl->dl', gamma_nd * p_nd, vander)       # (D, L)
    fft_len = T + L
    k_f = jnp.fft.rfft(k.astype(jnp.float32), n=fft_len)
    x_f = jnp.fft.rfft(x_bdt.astype(jnp.float32), n=fft_len)
    out = jnp.fft.irfft(x_f * k_f, n=fft_len)[..., :T]          # (B, D, T)
    out = jnp.transpose(out, (2, 0, 1)).astype(x_tbd.dtype) + residual
    return jax.nn.silu(out)


# ---------------------------------------------------------------------------
# Self-test
# ---------------------------------------------------------------------------
if __name__ == "__main__":
    key = jax.random.PRNGKey(0)
    ks = jax.random.split(key, 6)

    def make_params(D, N, kk):
        k1, k2, k3, k4 = jax.random.split(kk, 4)
        delta = jax.random.normal(k1, (D, N), jnp.float32)
        alpha = jax.random.normal(k2, (D, N), jnp.float32)
        gamma = jax.random.normal(k3, (D, N), jnp.float32) * 0.5
        omega = jax.random.normal(k4, (D,), jnp.float32) * 0.5
        pp = jax.nn.sigmoid(delta)                               # (D, N) in (0,1)
        qq = 1.0 - pp * jax.nn.sigmoid(alpha)                    # (D, N) in (0,1)
        return pp.T, jnp.log(qq).T, gamma.T, omega[None, :]

    def check(out, ref, tag):
        err = float(jnp.max(jnp.abs(out - ref)))
        assert jnp.allclose(out, ref, atol=1e-3, rtol=1e-3), (tag, err)

    # ---- Test 1: recurrence path (truncation=None), no mask -----------------
    T, B, D, N = 24, 2, 128, 2
    p_nd, logq_nd, gamma_nd, omega_1d = make_params(D, N, ks[0])
    x = jax.random.normal(ks[1], (T, B, D), jnp.float32)
    ref = reference_forward(x, p_nd, logq_nd, gamma_nd, omega_1d)
    out = base_moving_layer_forward(x, p_nd, logq_nd, gamma_nd, omega_1d,
                                    t_chunk=8, c_tile=128)
    out = jax.block_until_ready(out)
    assert out.shape == (T, B, D) and out.dtype == x.dtype
    check(out, ref, "t1_explicit")

    # ---- Test 1b: same, default tile selection -------------------------------
    out_d = jax.block_until_ready(
        base_moving_layer_forward(x, p_nd, logq_nd, gamma_nd, omega_1d))
    check(out_d, ref, "t1_default")

    # ---- Test 2: recurrence path with a padding mask -------------------------
    pad_mask = jnp.zeros((B, T), jnp.float32).at[1, 18:].set(1.0)
    ref2 = reference_forward(x, p_nd, logq_nd, gamma_nd, omega_1d,
                             padding_mask=pad_mask)
    out2 = jax.block_until_ready(
        base_moving_layer_forward(x, p_nd, logq_nd, gamma_nd, omega_1d,
                                  padding_mask=pad_mask, t_chunk=8,
                                  c_tile=128))
    check(out2, ref2, "t2_masked")

    # ---- Test 3: truncated path (L < T), D < 128, mask, multiple T tiles -----
    T3, B3, D3, N3 = 40, 2, 32, 3
    p3, lq3, g3, w3 = make_params(D3, N3, ks[2])
    x3 = jax.random.normal(ks[3], (T3, B3, D3), jnp.float32)
    mask3 = jnp.zeros((B3, T3), jnp.float32).at[0, 30:].set(1.0)
    ref3 = reference_forward(x3, p3, lq3, g3, w3, padding_mask=mask3,
                             truncation=5)
    out3 = jax.block_until_ready(
        base_moving_layer_forward(x3, p3, lq3, g3, w3, padding_mask=mask3,
                                  truncation=5, t_chunk=16, c_tile=128))
    assert out3.shape == (T3, B3, D3) and out3.dtype == x3.dtype
    check(out3, ref3, "t3_trunc_masked")

    # ---- Test 4: truncated path, no mask, flat layout, defaults --------------
    ref4 = reference_forward(x3, p3, lq3, g3, w3, truncation=7)
    out4 = jax.block_until_ready(
        base_moving_layer_forward(x3, p3, lq3, g3, w3, truncation=7))
    check(out4, ref4, "t4_trunc_flat")

    print("KERNEL_OK")
</pallas_src>

<mosaic_0001>
module attributes {stable_mosaic.version = 11 : i64} {
  func.func @_ema_scan_kernel(%arg0: i32, %arg1: i32, %arg2: memref<1x8x128xf32, #tpu.memory_space<vmem>>, %arg3: memref<8x8x128xf32, #tpu.memory_space<vmem>>, %arg4: memref<2x8x128xf32, #tpu.memory_space<vmem>>, %arg5: memref<2x8x128xf32, #tpu.memory_space<vmem>>, %arg6: memref<2x128xf32, #tpu.memory_space<vmem>>, %arg7: memref<1x128xf32, #tpu.memory_space<vmem>>, %arg8: memref<1x8x128xf32, #tpu.memory_space<vmem>>, %arg9: memref<2x128xf32, #tpu.memory_space<vmem>>) attributes {dimension_semantics = [#tpu.dimension_semantics<parallel>, #tpu.dimension_semantics<arbitrary>], iteration_bounds = array<i64: 2, 3>, scalar_prefetch = 0 : i64, scratch_operands = 1 : i64, tpu.core_type = #tpu.core_type<tc>, window_params = [{transform_indices = @transform_0, window_bounds = array<i64: 1, 8, 128>}, {transform_indices = @transform_1, window_bounds = array<i64: 8, 8, 128>}, {transform_indices = @transform_2, window_bounds = array<i64: 2, 8, 128>}, {transform_indices = @transform_3, window_bounds = array<i64: 2, 8, 128>}, {transform_indices = @transform_4, window_bounds = array<i64: 2, 128>}, {transform_indices = @transform_5, window_bounds = array<i64: 1, 128>}, {transform_indices = @transform_6, window_bounds = array<i64: 1, 8, 128>}]} {
    %c0_i32 = arith.constant 0 : i32
    %0 = arith.cmpi eq, %arg1, %c0_i32 : i32
    %1 = arith.extui %0 : i1 to i32
    %c0_i32_0 = arith.constant 0 : i32
    %2 = arith.cmpi ne, %1, %c0_i32_0 : i32
    scf.if %2 {
      %cst_51 = arith.constant 0.000000e+00 : f32
      %88 = vector.broadcast %cst_51 : f32 to vector<2x128xf32>
      %c0_52 = arith.constant 0 : index
      %c0_53 = arith.constant 0 : index
      %89 = vector.load %arg9[%c0_52, %c0_53] : memref<2x128xf32, #tpu.memory_space<vmem>>, vector<2x128xf32>
      tpu.vector_store %arg9[%c0_52, %c0_53], %88 {strides = array<i32>} : memref<2x128xf32, #tpu.memory_space<vmem>>, vector<2x128xf32>,
    } else {
    }
    %c0 = arith.constant 0 : index
    %c0_1 = arith.constant 0 : index
    %3 = vector.load %arg9[%c0, %c0_1] : memref<2x128xf32, #tpu.memory_space<vmem>>, vector<1x128xf32>
    %c1 = arith.constant 1 : index
    %c0_2 = arith.constant 0 : index
    %4 = vector.load %arg9[%c1, %c0_2] : memref<2x128xf32, #tpu.memory_space<vmem>>, vector<1x128xf32>
    %c0_i32_3 = arith.constant 0 : i32
    %5 = arith.index_cast %c0_i32_3 : i32 to index
    %c0_4 = arith.constant 0 : index
    %c0_5 = arith.constant 0 : index
    %6 = vector.load %arg2[%5, %c0_4, %c0_5] : memref<1x8x128xf32, #tpu.memory_space<vmem>>, vector<1x8x128xf32>
    %7 = vector.shape_cast %6 : vector<1x8x128xf32> to vector<8x128xf32>
    %c0_6 = arith.constant 0 : index
    %c0_7 = arith.constant 0 : index
    %c0_8 = arith.constant 0 : index
    %8 = vector.load %arg4[%c0_6, %c0_7, %c0_8] : memref<2x8x128xf32, #tpu.memory_space<vmem>>, vector<1x8x128xf32>
    %9 = vector.shape_cast %8 : vector<1x8x128xf32> to vector<8x128xf32>
    %10 = vector.broadcast %3 : vector<1x128xf32> to vector<8x128xf32>
    %11 = arith.mulf %9, %10 : vector<8x128xf32>
    %c1_9 = arith.constant 1 : index
    %c0_10 = arith.constant 0 : index
    %c0_11 = arith.constant 0 : index
    %12 = vector.load %arg4[%c1_9, %c0_10, %c0_11] : memref<2x8x128xf32, #tpu.memory_space<vmem>>, vector<1x8x128xf32>
    %13 = vector.shape_cast %12 : vector<1x8x128xf32> to vector<8x128xf32>
    %14 = vector.broadcast %4 : vector<1x128xf32> to vector<8x128xf32>
    %15 = arith.mulf %13, %14 : vector<8x128xf32>
    %16 = arith.addf %11, %15 : vector<8x128xf32>
    %c0_12 = arith.constant 0 : index
    %c0_13 = arith.constant 0 : index
    %c0_14 = arith.constant 0 : index
    %17 = vector.load %arg3[%c0_12, %c0_13, %c0_14] : memref<8x8x128xf32, #tpu.memory_space<vmem>>, vector<1x8x128xf32>
    %18 = vector.shape_cast %17 : vector<1x8x128xf32> to vector<8x128xf32>
    %19 = arith.mulf %18, %7 : vector<8x128xf32>
    %20 = arith.addf %16, %19 : vector<8x128xf32>
    %c1_15 = arith.constant 1 : index
    %c0_16 = arith.constant 0 : index
    %c0_17 = arith.constant 0 : index
    %21 = vector.load %arg3[%c1_15, %c0_16, %c0_17] : memref<8x8x128xf32, #tpu.memory_space<vmem>>, vector<1x8x128xf32>
    %22 = vector.shape_cast %21 : vector<1x8x128xf32> to vector<8x128xf32>
    %c1_i32 = arith.constant 1 : i32
    %23 = tpu.dynamic_rotate %7 by %c1_i32 dim 0 : vector<8x128xf32>, i32 -> vector<8x128xf32>
    %24 = arith.mulf %22, %23 : vector<8x128xf32>
    %25 = arith.addf %20, %24 : vector<8x128xf32>
    %c2 = arith.constant 2 : index
    %c0_18 = arith.constant 0 : index
    %c0_19 = arith.constant 0 : index
    %26 = vector.load %arg3[%c2, %c0_18, %c0_19] : memref<8x8x128xf32, #tpu.memory_space<vmem>>, vector<1x8x128xf32>
    %27 = vector.shape_cast %26 : vector<1x8x128xf32> to vector<8x128xf32>
    %c2_i32 = arith.constant 2 : i32
    %28 = tpu.dynamic_rotate %7 by %c2_i32 dim 0 : vector<8x128xf32>, i32 -> vector<8x128xf32>
    %29 = arith.mulf %27, %28 : vector<8x128xf32>
    %30 = arith.addf %25, %29 : vector<8x128xf32>
    %c3 = arith.constant 3 : index
    %c0_20 = arith.constant 0 : index
    %c0_21 = arith.constant 0 : index
    %31 = vector.load %arg3[%c3, %c0_20, %c0_21] : memref<8x8x128xf32, #tpu.memory_space<vmem>>, vector<1x8x128xf32>
    %32 = vector.shape_cast %31 : vector<1x8x128xf32> to vector<8x128xf32>
    %c3_i32 = arith.constant 3 : i32
    %33 = tpu.dynamic_rotate %7 by %c3_i32 dim 0 : vector<8x128xf32>, i32 -> vector<8x128xf32>
    %34 = arith.mulf %32, %33 : vector<8x128xf32>
    %35 = arith.addf %30, %34 : vector<8x128xf32>
    %c4 = arith.constant 4 : index
    %c0_22 = arith.constant 0 : index
    %c0_23 = arith.constant 0 : index
    %36 = vector.load %arg3[%c4, %c0_22, %c0_23] : memref<8x8x128xf32, #tpu.memory_space<vmem>>, vector<1x8x128xf32>
    %37 = vector.shape_cast %36 : vector<1x8x128xf32> to vector<8x128xf32>
    %c4_i32 = arith.constant 4 : i32
    %38 = tpu.dynamic_rotate %7 by %c4_i32 dim 0 : vector<8x128xf32>, i32 -> vector<8x128xf32>
    %39 = arith.mulf %37, %38 : vector<8x128xf32>
    %40 = arith.addf %35, %39 : vector<8x128xf32>
    %c5 = arith.constant 5 : index
    %c0_24 = arith.constant 0 : index
    %c0_25 = arith.constant 0 : index
    %41 = vector.load %arg3[%c5, %c0_24, %c0_25] : memref<8x8x128xf32, #tpu.memory_space<vmem>>, vector<1x8x128xf32>
    %42 = vector.shape_cast %41 : vector<1x8x128xf32> to vector<8x128xf32>
    %c5_i32 = arith.constant 5 : i32
    %43 = tpu.dynamic_rotate %7 by %c5_i32 dim 0 : vector<8x128xf32>, i32 -> vector<8x128xf32>
    %44 = arith.mulf %42, %43 : vector<8x128xf32>
    %45 = arith.addf %40, %44 : vector<8x128xf32>
    %c6 = arith.constant 6 : index
    %c0_26 = arith.constant 0 : index
    %c0_27 = arith.constant 0 : index
    %46 = vector.load %arg3[%c6, %c0_26, %c0_27] : memref<8x8x128xf32, #tpu.memory_space<vmem>>, vector<1x8x128xf32>
    %47 = vector.shape_cast %46 : vector<1x8x128xf32> to vector<8x128xf32>
    %c6_i32 = arith.constant 6 : i32
    %48 = tpu.dynamic_rotate %7 by %c6_i32 dim 0 : vector<8x128xf32>, i32 -> vector<8x128xf32>
    %49 = arith.mulf %47, %48 : vector<8x128xf32>
    %50 = arith.addf %45, %49 : vector<8x128xf32>
    %c7 = arith.constant 7 : index
    %c0_28 = arith.constant 0 : index
    %c0_29 = arith.constant 0 : index
    %51 = vector.load %arg3[%c7, %c0_28, %c0_29] : memref<8x8x128xf32, #tpu.memory_space<vmem>>, vector<1x8x128xf32>
    %52 = vector.shape_cast %51 : vector<1x8x128xf32> to vector<8x128xf32>
    %c7_i32 = arith.constant 7 : i32
    %53 = tpu.dynamic_rotate %7 by %c7_i32 dim 0 : vector<8x128xf32>, i32 -> vector<8x128xf32>
    %54 = arith.mulf %52, %53 : vector<8x128xf32>
    %55 = arith.addf %50, %54 : vector<8x128xf32>
    %c0_30 = arith.constant 0 : index
    %c0_31 = arith.constant 0 : index
    %56 = vector.load %arg7[%c0_30, %c0_31] : memref<1x128xf32, #tpu.memory_space<vmem>>, vector<1x128xf32>
    %57 = vector.broadcast %56 : vector<1x128xf32> to vector<8x128xf32>
    %58 = arith.mulf %7, %57 : vector<8x128xf32>
    %59 = arith.addf %55, %58 : vector<8x128xf32>
    %60 = arith.negf %59 : vector<8x128xf32>
    %61 = math.exp %60 : vector<8x128xf32>
    %cst = arith.constant 1.000000e+00 : f32
    %62 = vector.broadcast %cst : f32 to vector<8x128xf32>
    %63 = arith.addf %62, %61 : vector<8x128xf32>
    %64 = arith.divf %62, %63 : vector<8x128xf32>
    %65 = arith.mulf %59, %64 : vector<8x128xf32>
    %66 = arith.index_cast %c0_i32_3 : i32 to index
    %c0_32 = arith.constant 0 : index
    %c0_33 = arith.constant 0 : index
    %67 = vector.load %arg8[%66, %c0_32, %c0_33] : memref<1x8x128xf32, #tpu.memory_space<vmem>>, vector<1x8x128xf32>
    %68 = vector.shape_cast %67 : vector<1x8x128xf32> to vector<8x128xf32>
    %69 = vector.shape_cast %65 : vector<8x128xf32> to vector<1x8x128xf32>
    tpu.vector_store %arg8[%66, %c0_32, %c0_33], %69 {strides = array<i32>} : memref<1x8x128xf32, #tpu.memory_space<vmem>>, vector<1x8x128xf32>,
    %c0_34 = arith.constant 0 : index
    %c0_35 = arith.constant 0 : index
    %c0_36 = arith.constant 0 : index
    %70 = vector.load %arg5[%c0_34, %c0_35, %c0_36] : memref<2x8x128xf32, #tpu.memory_space<vmem>>, vector<1x8x128xf32>
    %71 = vector.shape_cast %70 : vector<1x8x128xf32> to vector<8x128xf32>
    %72 = arith.mulf %71, %7 : vector<8x128xf32>
    %cst_37 = arith.constant dense<0.000000e+00> : vector<128xf32>
    %73 = vector.multi_reduction <add>, %72, %cst_37 [0] : vector<8x128xf32> to vector<128xf32>
    %74 = vector.shape_cast %73 : vector<128xf32> to vector<1x128xf32>
    %c0_38 = arith.constant 0 : index
    %c0_39 = arith.constant 0 : index
    %75 = vector.load %arg6[%c0_38, %c0_39] : memref<2x128xf32, #tpu.memory_space<vmem>>, vector<1x128xf32>
    %76 = arith.mulf %75, %3 : vector<1x128xf32>
    %77 = arith.addf %76, %74 : vector<1x128xf32>
    %c1_40 = arith.constant 1 : index
    %c0_41 = arith.constant 0 : index
    %c0_42 = arith.constant 0 : index
    %78 = vector.load %arg5[%c1_40, %c0_41, %c0_42] : memref<2x8x128xf32, #tpu.memory_space<vmem>>, vector<1x8x128xf32>
    %79 = vector.shape_cast %78 : vector<1x8x128xf32> to vector<8x128xf32>
    %80 = arith.mulf %79, %7 : vector<8x128xf32>
    %cst_43 = arith.constant dense<0.000000e+00> : vector<128xf32>
    %81 = vector.multi_reduction <add>, %80, %cst_43 [0] : vector<8x128xf32> to vector<128xf32>
    %82 = vector.shape_cast %81 : vector<128xf32> to vector<1x128xf32>
    %c1_44 = arith.constant 1 : index
    %c0_45 = arith.constant 0 : index
    %83 = vector.load %arg6[%c1_44, %c0_45] : memref<2x128xf32, #tpu.memory_space<vmem>>, vector<1x128xf32>
    %84 = arith.mulf %83, %4 : vector<1x128xf32>
    %85 = arith.addf %84, %82 : vector<1x128xf32>
    %c1_i32_46 = arith.constant 1 : i32
    %c0_47 = arith.constant 0 : index
    %c0_48 = arith.constant 0 : index
    %86 = vector.load %arg9[%c0_47, %c0_48] : memref<2x128xf32, #tpu.memory_space<vmem>>, vector<1x128xf32>
    tpu.vector_store %arg9[%c0_47, %c0_48], %77 {strides = array<i32>} : memref<2x128xf32, #tpu.memory_space<vmem>>, vector<1x128xf32>,
    %c1_49 = arith.constant 1 : index
    %c0_50 = arith.constant 0 : index
    %87 = vector.load %arg9[%c1_49, %c0_50] : memref<2x128xf32, #tpu.memory_space<vmem>>, vector<1x128xf32>
    tpu.vector_store %arg9[%c1_49, %c0_50], %85 {strides = array<i32>} : memref<2x128xf32, #tpu.memory_space<vmem>>, vector<1x128xf32>,
    return
  }
  func.func @transform_0(%arg0: i32, %arg1: i32) -> (i32, i32, i32) {
    %c0_i32 = arith.constant 0 : i32
    %c0_i32_0 = arith.constant 0 : i32
    return %arg1, %c0_i32, %arg0 : i32, i32, i32
  }
  func.func @transform_1(%arg0: i32, %arg1: i32) -> (i32, i32, i32) {
    %c0_i32 = arith.constant 0 : i32
    %c0_i32_0 = arith.constant 0 : i32
    %c0_i32_1 = arith.constant 0 : i32
    return %c0_i32, %c0_i32_0, %arg0 : i32, i32, i32
  }
  func.func @transform_2(%arg0: i32, %arg1: i32) -> (i32, i32, i32) {
    %c0_i32 = arith.constant 0 : i32
    %c0_i32_0 = arith.constant 0 : i32
    %c0_i32_1 = arith.constant 0 : i32
    return %c0_i32, %c0_i32_0, %arg0 : i32, i32, i32
  }
  func.func @transform_3(%arg0: i32, %arg1: i32) -> (i32, i32, i32) {
    %c0_i32 = arith.constant 0 : i32
    %c0_i32_0 = arith.constant 0 : i32
    %c0_i32_1 = arith.constant 0 : i32
    return %c0_i32, %c0_i32_0, %arg0 : i32, i32, i32
  }
  func.func @transform_4(%arg0: i32, %arg1: i32) -> (i32, i32) {
    %c0_i32 = arith.constant 0 : i32
    %c0_i32_0 = arith.constant 0 : i32
    return %c0_i32, %arg0 : i32, i32
  }
  func.func @transform_5(%arg0: i32, %arg1: i32) -> (i32, i32) {
    %c0_i32 = arith.constant 0 : i32
    %c0_i32_0 = arith.constant 0 : i32
    return %c0_i32, %arg0 : i32, i32
  }
  func.func @transform_6(%arg0: i32, %arg1: i32) -> (i32, i32, i32) {
    %c0_i32 = arith.constant 0 : i32
    %c0_i32_0 = arith.constant 0 : i32
    return %arg1, %c0_i32, %arg0 : i32, i32, i32
  }
}

</mosaic_0001>

<llo_original>
// kernel: tpu_custom_call.1
$region0: #{tpu_custom_call.1}
  #allocation0 [shape = 'u32[]', space=smem, size = 0x4, offset = 0x4, fixed_abs, tag = 'smem constant byte address 0x4 - core index']
  #allocation1 [shape = 'u32[144,128]{1,0:T(1,128)}', space=vmem, size = 0x12000, scoped, tag = 'internal scratch']
  #allocation2 [shape = 'f32[2,128]{1,0:T(2,128)}', space=vmem, size = 0x400, scoped, tag = 'scratch operand']
  %s0 = inlined_call_operand.hbm [shape: f32[3,8,256], index: 0, kind: input, shape index: {}]
  %s1 = inlined_call_operand.hbm [shape: f32[8,8,256], index: 1, kind: input, shape index: {}]
  %s2 = inlined_call_operand.hbm [shape: f32[2,8,256], index: 2, kind: input, shape index: {}]
  %s3 = inlined_call_operand.hbm [shape: f32[2,8,256], index: 3, kind: input, shape index: {}]
  %s4 = inlined_call_operand.vmem [shape: f32[2,256], index: 4, kind: input, shape index: {}]
  %s5 = inlined_call_operand.vmem [shape: f32[1,256], index: 5, kind: input, shape index: {}]
  %s6 = inlined_call_operand.hbm [shape: f32[3,8,256], index: 6, kind: output, shape index: {}]
  %s7 = sld [smem:[#allocation0]]
  $region77: #{tpu_custom_call.1} parent=0
    _
  %s9 = ssub.s32 1, %s7
  %s10 = scalar_select 0, %s9, %s7
  $region1: #{tpu_custom_call.1} parent=0
    #allocation3 [shape = 'u8[8192]{0}', space=vmem, size = 0x2000, scoped, tag = 'input window, operand 0']
    #allocation4 [shape = 's32[2]{0}', space=sflag, size = 0x8, scoped, tag = 'scoped memory for tpu_custom_call.1']
    #allocation5 [shape = 's32[2]{0}', space=sflag, size = 0x8, scoped, tag = 'scoped memory for tpu_custom_call.1']
    #allocation6 [shape = 'u8[65536]{0}', space=vmem, size = 0x10000, scoped, tag = 'input window, operand 1']
    #allocation7 [shape = 's32[2]{0}', space=sflag, size = 0x8, scoped, tag = 'scoped memory for tpu_custom_call.1']
    #allocation8 [shape = 'u8[16384]{0}', space=vmem, size = 0x4000, scoped, tag = 'input window, operand 2']
    #allocation9 [shape = 'u8[16384]{0}', space=vmem, size = 0x4000, scoped, tag = 'input window, operand 3']
    #allocation10 [shape = 's32[2]{0}', space=sflag, size = 0x8, scoped, tag = 'scoped memory for tpu_custom_call.1']
    #allocation11 [shape = 'u8[8192]{0}', space=vmem, size = 0x2000, scoped, tag = 'output window, operand 0']
    %11 = vsyncpa [#allocation4], 0
    %s12 = scalar_lea.sflag [#allocation4], 1
    %13 = vsyncpa %s12, 0
    %14 = vsyncpa [#allocation7], 0
    %s15 = scalar_lea.sflag [#allocation7], 1
    %16 = vsyncpa %s15, 0
    %17 = vsyncpa [#allocation10], 0
    %s18 = scalar_lea.sflag [#allocation10], 1
    %19 = vsyncpa %s18, 0
    %20 = vsyncpa [#allocation5], 0
    %s21 = scalar_lea.sflag [#allocation5], 1
    %22 = vsyncpa %s21, 0
    loop: start=0, step=1, limit=8
    $region2: #{tpu_custom_call.1} parent=1 // loop_pre_header
      _
    $region3: #{tpu_custom_call.1} parent=1 // loop_header
      %s24 = sphi 0, %s28
      %p25 = scmp.ge.s32.totalorder %s24, 8
      %s31 = sphi 0, %s43
      %s32 = sphi 0, %s39
      %s33 = sphi 0, %s31
      %s34 = sphi 0, %s32
      %s35 = sphi 0, %s33
      %s36 = sphi 0, %s34
      %s48 = sphi 0, %s50
      %s51 = sphi 0, %s48
      %s52 = sphi 0, %s51
      %s68 = sphi 0, %s52
      %s74 = sphi 0, %s76
      %s77 = sphi 0, %s74
      %s78 = sphi 0, %s77
      %s94 = sphi 0, %s78
      %s100 = sphi 0, %s102
      %s103 = sphi 0, %s100
      %s104 = sphi 0, %s103
      %s120 = sphi 0, %s104
      %s126 = sphi 0, %s128
      %s129 = sphi 0, %s126
      %s130 = sphi 0, %s129
      %s146 = sphi 0, %s130
      %s152 = sphi 0, %s154
      %s155 = sphi 0, %s152
      %s156 = sphi 0, %s155
      %s172 = sphi 0, %s156
      %s178 = sphi 0, %s180
      %s181 = sphi 0, %s178
      %s182 = sphi 0, %s181
      %s198 = sphi 0, %s182
      %s206 = sphi 0, %s208
      %s209 = sphi 0, %s206
      %s210 = sphi 0, %s209
      %s226 = sphi 0, %s210
    $region4: #{tpu_custom_call.1} parent=1 // loop_header_branch
      %27 = sbr.rel (%p25) target = $region8
    $region5: #{tpu_custom_call.1} parent=1 // loop_body
      %s29 = ssub.s32 %s24, 1
      %s30 = ssub.s32 %s24, 2
      %s37 = sadd.s32 1, %s32
      %p38 = scmp.ge.s32.totalorder %s37, 3
      %s39 = scalar_select %p38, 0, %s37
      %s40 = sadd.s32 1, %s31
      %s41 = scalar_select %p38, %s40, %s31
      %p42 = scmp.ge.s32.totalorder %s41, 2
      %s43 = scalar_select %p42, 0, %s41
      %s44 = ssub.s32 %s32, %s39
      %s45 = ssub.s32 %s31, %s43
      %s46 = sor.u32 %s44, %s45
      %p47 = scmp.eq.s32.totalorder %s46, 0
      %s49 = sadd.s32 %s48, 1
      %s50 = scalar_select %p47, %s48, %s49
      %p53 = pneg %p47
      %p54 = scmp.eq.s32.totalorder %s24, 5
      %p55 = por %p53, %p54
      %p56 = scmp.ne.s32.totalorder %s48, %s51
      %p57 = scmp.eq.s32.totalorder %s24, 0
      %p58 = por %p56, %p57
      %p59 = scmp.ne.s32.totalorder %s48, %s51
      %p60 = scmp.eq.s32.totalorder %s29, 5
      %p61 = por %p59, %p60
      %p62 = scmp.ne.s32.totalorder %s51, %s52
      %p63 = scmp.eq.s32.totalorder %s29, 0
      %p64 = por %p62, %p63
      %p65 = scmp.ne.s32.totalorder %s51, %s52
      %p66 = scmp.eq.s32.totalorder %s30, 5
      %p67 = por %p65, %p66
      %p69 = scmp.ne.s32.totalorder %s52, %s68
      %p70 = scmp.eq.s32.totalorder %s30, 0
      %p71 = por %p69, %p70
      %s72 = ssub.s32 %s31, %s43
      %p73 = scmp.eq.s32.totalorder %s72, 0
      %s75 = sadd.s32 %s74, 1
      %s76 = scalar_select %p73, %s74, %s75
      %p79 = pneg %p73
      %p80 = scmp.eq.s32.totalorder %s24, 5
      %p81 = por %p79, %p80
      %p82 = scmp.ne.s32.totalorder %s74, %s77
      %p83 = scmp.eq.s32.totalorder %s24, 0
      %p84 = por %p82, %p83
      %p85 = scmp.ne.s32.totalorder %s74, %s77
      %p86 = scmp.eq.s32.totalorder %s29, 5
      %p87 = por %p85, %p86
      %p88 = scmp.ne.s32.totalorder %s77, %s78
      %p89 = scmp.eq.s32.totalorder %s29, 0
      %p90 = por %p88, %p89
      %p91 = scmp.ne.s32.totalorder %s77, %s78
      %p92 = scmp.eq.s32.totalorder %s30, 5
      %p93 = por %p91, %p92
      %p95 = scmp.ne.s32.totalorder %s78, %s94
      %p96 = scmp.eq.s32.totalorder %s30, 0
      %p97 = por %p95, %p96
      %s98 = ssub.s32 %s31, %s43
      %p99 = scmp.eq.s32.totalorder %s98, 0
      %s101 = sadd.s32 %s100, 1
      %s102 = scalar_select %p99, %s100, %s101
      %p105 = pneg %p99
      %p106 = scmp.eq.s32.totalorder %s24, 5
      %p107 = por %p105, %p106
      %p108 = scmp.ne.s32.totalorder %s100, %s103
      %p109 = scmp.eq.s32.totalorder %s24, 0
      %p110 = por %p108, %p109
      %p111 = scmp.ne.s32.totalorder %s100, %s103
      %p112 = scmp.eq.s32.totalorder %s29, 5
      %p113 = por %p111, %p112
      %p114 = scmp.ne.s32.totalorder %s103, %s104
      %p115 = scmp.eq.s32.totalorder %s29, 0
      %p116 = por %p114, %p115
      %p117 = scmp.ne.s32.totalorder %s103, %s104
      %p118 = scmp.eq.s32.totalorder %s30, 5
      %p119 = por %p117, %p118
      %p121 = scmp.ne.s32.totalorder %s104, %s120
      %p122 = scmp.eq.s32.totalorder %s30, 0
      %p123 = por %p121, %p122
      %s124 = ssub.s32 %s31, %s43
      %p125 = scmp.eq.s32.totalorder %s124, 0
      %s127 = sadd.s32 %s126, 1
      %s128 = scalar_select %p125, %s126, %s127
      %p131 = pneg %p125
      %p132 = scmp.eq.s32.totalorder %s24, 5
      %p133 = por %p131, %p132
      %p134 = scmp.ne.s32.totalorder %s126, %s129
      %p135 = scmp.eq.s32.totalorder %s24, 0
      %p136 = por %p134, %p135
      %p137 = scmp.ne.s32.totalorder %s126, %s129
      %p138 = scmp.eq.s32.totalorder %s29, 5
      %p139 = por %p137, %p138
      %p140 = scmp.ne.s32.totalorder %s129, %s130
      %p141 = scmp.eq.s32.totalorder %s29, 0
      %p142 = por %p140, %p141
      %p143 = scmp.ne.s32.totalorder %s129, %s130
      %p144 = scmp.eq.s32.totalorder %s30, 5
      %p145 = por %p143, %p144
      %p147 = scmp.ne.s32.totalorder %s130, %s146
      %p148 = scmp.eq.s32.totalorder %s30, 0
      %p149 = por %p147, %p148
      %s150 = ssub.s32 %s31, %s43
      %p151 = scmp.eq.s32.totalorder %s150, 0
      %s153 = sadd.s32 %s152, 1
      %s154 = scalar_select %p151, %s152, %s153
      %p157 = pneg %p151
      %p158 = scmp.eq.s32.totalorder %s24, 5
      %p159 = por %p157, %p158
      %p160 = scmp.ne.s32.totalorder %s152, %s155
      %p161 = scmp.eq.s32.totalorder %s24, 0
      %p162 = por %p160, %p161
      %p163 = scmp.ne.s32.totalorder %s152, %s155
      %p164 = scmp.eq.s32.totalorder %s29, 5
      %p165 = por %p163, %p164
      %p166 = scmp.ne.s32.totalorder %s155, %s156
      %p167 = scmp.eq.s32.totalorder %s29, 0
      %p168 = por %p166, %p167
      %p169 = scmp.ne.s32.totalorder %s155, %s156
      %p170 = scmp.eq.s32.totalorder %s30, 5
      %p171 = por %p169, %p170
      %p173 = scmp.ne.s32.totalorder %s156, %s172
      %p174 = scmp.eq.s32.totalorder %s30, 0
      %p175 = por %p173, %p174
      %s176 = ssub.s32 %s31, %s43
      %p177 = scmp.eq.s32.totalorder %s176, 0
      %s179 = sadd.s32 %s178, 1
      %s180 = scalar_select %p177, %s178, %s179
      %p183 = pneg %p177
      %p184 = scmp.eq.s32.totalorder %s24, 5
      %p185 = por %p183, %p184
      %p186 = scmp.ne.s32.totalorder %s178, %s181
      %p187 = scmp.eq.s32.totalorder %s24, 0
      %p188 = por %p186, %p187
      %p189 = scmp.ne.s32.totalorder %s178, %s181
      %p190 = scmp.eq.s32.totalorder %s29, 5
      %p191 = por %p189, %p190
      %p192 = scmp.ne.s32.totalorder %s181, %s182
      %p193 = scmp.eq.s32.totalorder %s29, 0
      %p194 = por %p192, %p193
      %p195 = scmp.ne.s32.totalorder %s181, %s182
      %p196 = scmp.eq.s32.totalorder %s30, 5
      %p197 = por %p195, %p196
      %p199 = scmp.ne.s32.totalorder %s182, %s198
      %p200 = scmp.eq.s32.totalorder %s30, 0
      %p201 = por %p199, %p200
      %s202 = ssub.s32 %s32, %s39
      %s203 = ssub.s32 %s31, %s43
      %s204 = sor.u32 %s202, %s203
      %p205 = scmp.eq.s32.totalorder %s204, 0
      %s207 = sadd.s32 %s206, 1
      %s208 = scalar_select %p205, %s206, %s207
      %p211 = pneg %p205
      %p212 = scmp.eq.s32.totalorder %s24, 5
      %p213 = por %p211, %p212
      %p214 = scmp.ne.s32.totalorder %s206, %s209
      %p215 = scmp.eq.s32.totalorder %s24, 0
      %p216 = por %p214, %p215
      %p217 = scmp.ne.s32.totalorder %s206, %s209
      %p218 = scmp.eq.s32.totalorder %s29, 5
      %p219 = por %p217, %p218
      %p220 = scmp.ne.s32.totalorder %s209, %s210
      %p221 = scmp.eq.s32.totalorder %s29, 0
      %p222 = por %p220, %p221
      %p223 = scmp.ne.s32.totalorder %s209, %s210
      %p224 = scmp.eq.s32.totalorder %s30, 5
      %p225 = por %p223, %p224
      %p227 = scmp.ne.s32.totalorder %s210, %s226
      %p228 = scmp.eq.s32.totalorder %s30, 0
      %p229 = por %p227, %p228
      %p230 = scmp.le.s32.totalorder 1, %s24
      %p231 = scmp.lt.s32.totalorder %s24, 7
      %p232 = pnand %p230, %p231
      %p233 = pneg %p232
      // Predicated region
      $region9: #{tpu_custom_call.1} parent=5 // pred_check
        _
      $region10: #{tpu_custom_call.1} parent=5 // pred_check_branch
        %235 = sbr.rel (%p232) target = $region12
      $region11: #{tpu_custom_call.1} parent=5 // pred_region
        %s236 = ssub.s32 %s24, 1
      $region12: #{tpu_custom_call.1} parent=5 // pred_fallthru
        _
      %p237 = scmp.lt.s32.totalorder %s24, 6
      // Predicated region
      $region13: #{tpu_custom_call.1} parent=5 // pred_check
        %p238 = pneg %p237
      $region14: #{tpu_custom_call.1} parent=5 // pred_check_branch
        %240 = sbr.rel (%p238) target = $region16
      $region15: #{tpu_custom_call.1} parent=5 // pred_region
        // Predicated region
        $region17: #{tpu_custom_call.1} parent=15 // pred_check
          %p241 = pneg %p58
        $region18: #{tpu_custom_call.1} parent=15 // pred_check_branch
          %243 = sbr.rel (%p241) target = $region20
        $region19: #{tpu_custom_call.1} parent=15 // pred_region
          %s244 = sand.u32 %s48, 1
          %s245 = scalar_lea.sflag [#allocation4], %s244
          %s246 = sand.u32 %s48, 1
          %s247 = smul.addr %s246, 8
          %s248 = scalar_lea.vmem [#allocation3], %s247
          %s250 = ssub.s32 128, 128
          %251 = vsyncadd %s245, %s250
          %s252 = smul.addr %s32, 2
          %s253 = sadd.s32 %s31, %s252
          %s254 = smul.addr %s253, 128
          %s255 = scalar_lea.hbm %s0, %s254
          %s257 = sshll.u32 %s248, 4
          %s258 = int_to_ptr.vmem [resolvable:$true] %s257
          %260 = dma.hbm_to_vmem [thread:$0]  %s255, 128, %s258, %s245
        $region20: #{tpu_custom_call.1} parent=15 // pred_fallthru
          _
        // Predicated region
        $region21: #{tpu_custom_call.1} parent=15 // pred_check
          %p261 = pneg %p84
        $region22: #{tpu_custom_call.1} parent=15 // pred_check_branch
          %263 = sbr.rel (%p261) target = $region24
        $region23: #{tpu_custom_call.1} parent=15 // pred_region
          %s264 = sand.u32 %s24, 1
          %s265 = scalar_lea.sflag [#allocation7], %s264
          %s266 = sand.u32 %s74, 1
          %s267 = smul.addr %s266, 64
          %s268 = scalar_lea.vmem [#allocation6], %s267
          %s270 = ssub.s32 1024, 1024
          %271 = vsyncadd %s265, %s270
          %s272 = smul.addr %s31, 128
          %s273 = scalar_lea.hbm %s1, %s272
          %s274 = sshll.u32 %s268, 4
          %s275 = int_to_ptr.vmem [resolvable:$true] %s274
          %280 = dma.hbm_to_vmem [thread:$0]  %s273, 1024, %s275, %s265, 256, 128, 8
        $region24: #{tpu_custom_call.1} parent=15 // pred_fallthru
          _
        // Predicated region
        $region25: #{tpu_custom_call.1} parent=15 // pred_check
          %p281 = pneg %p110
        $region26: #{tpu_custom_call.1} parent=15 // pred_check_branch
          %283 = sbr.rel (%p281) target = $region28
        $region27: #{tpu_custom_call.1} parent=15 // pred_region
          %s284 = sand.u32 %s24, 1
          %s285 = scalar_lea.sflag [#allocation7], %s284
          %s286 = sand.u32 %s100, 1
          %s287 = smul.addr %s286, 16
          %s288 = scalar_lea.vmem [#allocation8], %s287
          %s290 = ssub.s32 256, 256
          %291 = vsyncadd %s285, %s290
          %s292 = smul.addr %s31, 128
          %s293 = scalar_lea.hbm %s2, %s292
          %s294 = sshll.u32 %s288, 4
          %s295 = int_to_ptr.vmem [resolvable:$true] %s294
          %300 = dma.hbm_to_vmem [thread:$0]  %s293, 256, %s295, %s285, 256, 128, 8
        $region28: #{tpu_custom_call.1} parent=15 // pred_fallthru
          _
        // Predicated region
        $region29: #{tpu_custom_call.1} parent=15 // pred_check
          %p301 = pneg %p136
        $region30: #{tpu_custom_call.1} parent=15 // pred_check_branch
          %303 = sbr.rel (%p301) target = $region32
        $region31: #{tpu_custom_call.1} parent=15 // pred_region
          %s304 = sand.u32 %s126, 1
          %s305 = scalar_lea.sflag [#allocation10], %s304
          %s306 = sand.u32 %s126, 1
          %s307 = smul.addr %s306, 16
          %s308 = scalar_lea.vmem [#allocation9], %s307
          %s310 = ssub.s32 256, 256
          %311 = vsyncadd %s305, %s310
          %s312 = smul.addr %s31, 128
          %s313 = scalar_lea.hbm %s3, %s312
          %s314 = sshll.u32 %s308, 4
          %s315 = int_to_ptr.vmem [resolvable:$true] %s314
          %320 = dma.hbm_to_vmem [thread:$0]  %s313, 256, %s315, %s305, 256, 128, 8
        $region32: #{tpu_custom_call.1} parent=15 // pred_fallthru
          _
        // Predicated region
        $region33: #{tpu_custom_call.1} parent=15 // pred_check
          %p321 = pneg %p162
        $region34: #{tpu_custom_call.1} parent=15 // pred_check_branch
          %323 = sbr.rel (%p321) target = $region36
        $region35: #{tpu_custom_call.1} parent=15 // pred_region
          %p324 = scmp.lt.s32.totalorder %s31, 1
          %s325 = scalar_select %p324, %s31, 1
          %s326 = smul.addr %s325, 2
          %s327 = scalar_lea.vmem %s4, %s326
        $region36: #{tpu_custom_call.1} parent=15 // pred_fallthru
          _
        // Predicated region
        $region37: #{tpu_custom_call.1} parent=15 // pred_check
          %p328 = pneg %p188
        $region38: #{tpu_custom_call.1} parent=15 // pred_check_branch
          %330 = sbr.rel (%p328) target = $region40
        $region39: #{tpu_custom_call.1} parent=15 // pred_region
          %p331 = scmp.lt.s32.totalorder %s31, 1
          %s332 = scalar_select %p331, %s31, 1
          %s333 = scalar_lea.vmem %s5, %s332
        $region40: #{tpu_custom_call.1} parent=15 // pred_fallthru
          _
      $region16: #{tpu_custom_call.1} parent=5 // pred_fallthru
        _
      %p334 = scmp.le.s32.totalorder 1, %s24
      %p335 = scmp.lt.s32.totalorder %s24, 7
      %p336 = pnand %p334, %p335
      %p337 = pneg %p336
      // Predicated region
      $region41: #{tpu_custom_call.1} parent=5 // pred_check
        _
      $region42: #{tpu_custom_call.1} parent=5 // pred_check_branch
        %339 = sbr.rel (%p336) target = $region44
      $region43: #{tpu_custom_call.1} parent=5 // pred_region
        %s340 = ssub.s32 %s24, 1
        %s341 = sand.u32 %s51, 1
        %s342 = scalar_lea.sflag [#allocation4], %s341
        %s343 = sand.u32 %s51, 1
        %s344 = smul.addr %s343, 8
        %s345 = scalar_lea.vmem [#allocation3], %s344
        // Predicated region
        $region45: #{tpu_custom_call.1} parent=43 // pred_check
          %p346 = pneg %p64
        $region46: #{tpu_custom_call.1} parent=43 // pred_check_branch
          %348 = sbr.rel (%p346) target = $region48
        $region47: #{tpu_custom_call.1} parent=43 // pred_region
          %349 = dma.done %s342, 128
        $region48: #{tpu_custom_call.1} parent=43 // pred_fallthru
          _
        %s350 = sand.u32 %s29, 1
        %s351 = scalar_lea.sflag [#allocation7], %s350
        %s352 = sand.u32 %s77, 1
        %s353 = smul.addr %s352, 64
        %s354 = scalar_lea.vmem [#allocation6], %s353
        // Predicated region
        $region49: #{tpu_custom_call.1} parent=43 // pred_check
          %p355 = pneg %p90
        $region50: #{tpu_custom_call.1} parent=43 // pred_check_branch
          %357 = sbr.rel (%p355) target = $region52
        $region51: #{tpu_custom_call.1} parent=43 // pred_region
          %358 = dma.done %s351, 1024
        $region52: #{tpu_custom_call.1} parent=43 // pred_fallthru
          _
        %s359 = sand.u32 %s29, 1
        %s360 = scalar_lea.sflag [#allocation7], %s359
        %s361 = sand.u32 %s103, 1
        %s362 = smul.addr %s361, 16
        %s363 = scalar_lea.vmem [#allocation8], %s362
        // Predicated region
        $region53: #{tpu_custom_call.1} parent=43 // pred_check
          %p364 = pneg %p116
        $region54: #{tpu_custom_call.1} parent=43 // pred_check_branch
          %366 = sbr.rel (%p364) target = $region56
        $region55: #{tpu_custom_call.1} parent=43 // pred_region
          %367 = dma.done %s360, 256
        $region56: #{tpu_custom_call.1} parent=43 // pred_fallthru
          _
        %s368 = sand.u32 %s129, 1
        %s369 = scalar_lea.sflag [#allocation10], %s368
        %s370 = sand.u32 %s129, 1
        %s371 = smul.addr %s370, 16
        %s372 = scalar_lea.vmem [#allocation9], %s371
        // Predicated region
        $region57: #{tpu_custom_call.1} parent=43 // pred_check
          %p373 = pneg %p142
        $region58: #{tpu_custom_call.1} parent=43 // pred_check_branch
          %375 = sbr.rel (%p373) target = $region60
        $region59: #{tpu_custom_call.1} parent=43 // pred_region
          %376 = dma.done %s369, 256
        $region60: #{tpu_custom_call.1} parent=43 // pred_fallthru
          _
        %s377 = sand.u32 %s51, 1
        %s378 = scalar_lea.sflag [#allocation4], %s377
        %s379 = sand.u32 %s51, 1
        %s380 = smul.addr %s379, 8
        %s381 = scalar_lea.vmem [#allocation3], %s380
        %p382 = pneg %p64
        %p383 = pneg %p61
        %s384 = sand.u32 %s29, 1
        %s385 = scalar_lea.sflag [#allocation7], %s384
        %s386 = sand.u32 %s77, 1
        %s387 = smul.addr %s386, 64
        %s388 = scalar_lea.vmem [#allocation6], %s387
        %p389 = pneg %p90
        %p390 = pneg %p87
        %s391 = sand.u32 %s29, 1
        %s392 = scalar_lea.sflag [#allocation7], %s391
        %s393 = sand.u32 %s103, 1
        %s394 = smul.addr %s393, 16
        %s395 = scalar_lea.vmem [#allocation8], %s394
        %p396 = pneg %p116
        %p397 = pneg %p113
        %s398 = sand.u32 %s129, 1
        %s399 = scalar_lea.sflag [#allocation10], %s398
        %s400 = sand.u32 %s129, 1
        %s401 = smul.addr %s400, 16
        %s402 = scalar_lea.vmem [#allocation9], %s401
        %p403 = pneg %p142
        %p404 = pneg %p139
        %p405 = scmp.lt.s32.totalorder %s33, 1
        %s406 = scalar_select %p405, %s33, 1
        %s407 = smul.addr %s406, 2
        %s408 = scalar_lea.vmem %s4, %s407
        %p409 = pneg %p168
        %p410 = pneg %p165
        %p411 = scmp.lt.s32.totalorder %s33, 1
        %s412 = scalar_select %p411, %s33, 1
        %s413 = scalar_lea.vmem %s5, %s412
        %p414 = pneg %p194
        %p415 = pneg %p191
        %p416 = pneg %p222
        %p417 = pneg %p219
        %s418 = sand.u32 %s209, 1
        %s419 = scalar_lea.sflag [#allocation5], %s418
        %s420 = sand.u32 %s209, 1
        %s421 = smul.addr %s420, 8
        %s422 = scalar_lea.vmem [#allocation11], %s421
        %p423 = scmp.lt.s32.totalorder %s33, 1
        %s424 = scalar_select %p423, %s33, 1
        %s425 = smul.addr %s424, 2
        %s426 = scalar_lea.vmem %s4, %s425
        %p427 = scmp.lt.s32.totalorder %s33, 1
        %s428 = scalar_select %p427, %s33, 1
        %s429 = scalar_lea.vmem %s5, %s428
        %p430 = scmp.eq.s32.totalorder %s34, 0
        // Predicated region
        $region61: #{tpu_custom_call.1} parent=43 // pred_check
          %p431 = pneg %p430
        $region62: #{tpu_custom_call.1} parent=43 // pred_check_branch
          %433 = sbr.rel (%p431) target = $region64
        $region63: #{tpu_custom_call.1} parent=43 // pred_region
          %434 = vst [vmem:[#allocation2] sm:$0x3] 0.0
        $region64: #{tpu_custom_call.1} parent=43 // pred_fallthru
          _
        %v435 = vld [vmem:[#allocation2] sm:$0x1]
        %v436 = vld [vmem:[#allocation2 + $0x1] sm:$0x1]
        %v437 = vld [vmem:[%s345] sm:$0xff]
        %v438 = vld [vmem:[%s363] sm:$0xff]
        %v439 = vlaneseq
        %v440 = vshrl.u32 %v439, 7
        %v441 = vsub.s32 0, %v440
        %v442 = vrot.slane %v435, %v441
        %v443 = vmul.f32 %v438, %v442
        %s444 = scalar_lea.vmem %s363, 8 [#allocation8]
        %v445 = vld [vmem:[%s444] sm:$0xff]
        %v446 = vlaneseq
        %v447 = vshrl.u32 %v446, 7
        %v448 = vsub.s32 0, %v447
        %v449 = vrot.slane %v436, %v448
        %v450 = vmul.f32 %v445, %v449
        %v451 = vadd.f32 %v443, %v450
        %v452 = vld [vmem:[%s354] sm:$0xff]
        %v453 = vmul.f32 %v452, %v437
        %v454 = vadd.f32 %v451, %v453
        %s455 = scalar_lea.vmem %s354, 8 [#allocation6]
        %v456 = vld [vmem:[%s455] sm:$0xff]
        %v457 = vrot.slane %v437, 7
        %v458 = vmul.f32 %v456, %v457
        %v459 = vadd.f32 %v454, %v458
        %s460 = scalar_lea.vmem %s354, 16 [#allocation6]
        %v461 = vld [vmem:[%s460] sm:$0xff]
        %v462 = vrot.slane %v437, 6
        %v463 = vmul.f32 %v461, %v462
        %v464 = vadd.f32 %v459, %v463
        %s465 = scalar_lea.vmem %s354, 24 [#allocation6]
        %v466 = vld [vmem:[%s465] sm:$0xff]
        %v467 = vrot.slane %v437, 5
        %v468 = vmul.f32 %v466, %v467
        %v469 = vadd.f32 %v464, %v468
        %s470 = scalar_lea.vmem %s354, 32 [#allocation6]
        %v471 = vld [vmem:[%s470] sm:$0xff]
        %v472 = vrot.slane %v437, 4
        %v473 = vmul.f32 %v471, %v472
        %v474 = vadd.f32 %v469, %v473
        %s475 = scalar_lea.vmem %s354, 40 [#allocation6]
        %v476 = vld [vmem:[%s475] sm:$0xff]
        %v477 = vrot.slane %v437, 3
        %v478 = vmul.f32 %v476, %v477
        %v479 = vadd.f32 %v474, %v478
        %s480 = scalar_lea.vmem %s354, 48 [#allocation6]
        %v481 = vld [vmem:[%s480] sm:$0xff]
        %v482 = vrot.slane %v437, 2
        %v483 = vmul.f32 %v481, %v482
        %v484 = vadd.f32 %v479, %v483
        %s485 = scalar_lea.vmem %s354, 56 [#allocation6]
        %v486 = vld [vmem:[%s485] sm:$0xff]
        %v487 = vrot.slane %v437, 1
        %v488 = vmul.f32 %v486, %v487
        %v489 = vadd.f32 %v484, %v488
        %v490 = vld [vmem:[%s429] sm:$0x1]
        %v492 = vlaneseq
        %v493 = vshrl.u32 %v492, 7
        %v494 = vsub.s32 0, %v493
        %v495 = vrot.slane %v490, %v494
        %v497 = vmul.f32 %v437, %v495
        %v498 = vadd.f32 %v489, %v497
        %v499 = vxor.u32 %v498, 2147483648
        %v500 = vmul.f32 %v499, 1.442695
        %v501 = vpow.pop %v500
        %v502 = vadd.f32 %v501, 1.0
        %v503 = vrcp.pop %v502
        %v504 = vmul.f32 1.0, %v503
        %v505 = vmul.f32 %v498, %v504
        %506 = vst [vmem:[%s422] sm:$0xff] %v505
        %v507 = vld [vmem:[%s372] sm:$0xff]
        %v508 = vmul.f32 %v507, %v437
        %v509 = vrot.slane %v508, 4
        %v510 = vadd.f32 %v508, %v509
        %v511 = vrot.slane %v510, 2
        %v512 = vadd.f32 %v510, %v511
        %v513 = vrot.slane %v512, 1
        %v514 = vadd.f32 %v512, %v513
        %v515 = vld [vmem:[%s426] sm:$0x1]
        %v516 = vmul.f32 %v515, %v435
        %v517 = vadd.f32 %v516, %v514
        %s518 = scalar_lea.vmem %s372, 8 [#allocation9]
        %v519 = vld [vmem:[%s518] sm:$0xff]
        %v520 = vmul.f32 %v519, %v437
        %v521 = vrot.slane %v520, 4
        %v522 = vadd.f32 %v520, %v521
        %v523 = vrot.slane %v522, 2
        %v524 = vadd.f32 %v522, %v523
        %v525 = vrot.slane %v524, 1
        %v526 = vadd.f32 %v524, %v525
        %v527 = vld [vmem:[%s426 + $0x1] sm:$0x1]
        %v528 = vmul.f32 %v527, %v436
        %v529 = vadd.f32 %v528, %v526
        %530 = vst [vmem:[#allocation2] sm:$0x1] %v517
        %531 = vst [vmem:[#allocation2 + $0x1] sm:$0x1] %v529
        %s532 = sand.u32 %s209, 1
        %s533 = scalar_lea.sflag [#allocation5], %s532
        %s534 = sand.u32 %s209, 1
        %s535 = smul.addr %s534, 8
        %s536 = scalar_lea.vmem [#allocation11], %s535
        // Predicated region
        $region65: #{tpu_custom_call.1} parent=43 // pred_check
          %p537 = pneg %p219
        $region66: #{tpu_custom_call.1} parent=43 // pred_check_branch
          %539 = sbr.rel (%p537) target = $region68
        $region67: #{tpu_custom_call.1} parent=43 // pred_region
          %s541 = ssub.s32 128, 128
          %542 = vsyncadd %s533, %s541
          %s543 = smul.addr %s34, 2
          %s544 = sadd.s32 %s33, %s543
          %s545 = smul.addr %s544, 128
          %s546 = scalar_lea.hbm %s6, %s545
          %s548 = sshll.u32 %s536, 4
          %s549 = int_to_ptr.vmem [resolvable:$true] %s548
          %551 = dma.vmem_to_hbm [thread:$0]  %s549, 128, %s546, %s533
        $region68: #{tpu_custom_call.1} parent=43 // pred_fallthru
          _
      $region44: #{tpu_custom_call.1} parent=5 // pred_fallthru
        _
      %p552 = scmp.le.s32.totalorder 2, %s24
      // Predicated region
      $region69: #{tpu_custom_call.1} parent=5 // pred_check
        %p553 = pneg %p552
      $region70: #{tpu_custom_call.1} parent=5 // pred_check_branch
        %555 = sbr.rel (%p553) target = $region72
      $region71: #{tpu_custom_call.1} parent=5 // pred_region
        %s556 = ssub.s32 %s24, 2
        // Predicated region
        $region73: #{tpu_custom_call.1} parent=71 // pred_check
          %p557 = pneg %p225
        $region74: #{tpu_custom_call.1} parent=71 // pred_check_branch
          %559 = sbr.rel (%p557) target = $region76
        $region75: #{tpu_custom_call.1} parent=71 // pred_region
          %s560 = sand.u32 %s210, 1
          %s561 = scalar_lea.sflag [#allocation5], %s560
          %s562 = sand.u32 %s210, 1
          %s563 = smul.addr %s562, 8
          %s564 = scalar_lea.vmem [#allocation11], %s563
          %565 = dma.done %s561, 128
        $region76: #{tpu_custom_call.1} parent=71 // pred_fallthru
          _
      $region72: #{tpu_custom_call.1} parent=5 // pred_fallthru
        _
    $region6: #{tpu_custom_call.1} parent=1 // loop_footer
      %s28 = sadd.s32 1, %s24
    $region7: #{tpu_custom_call.1} parent=1 // loop_footer_branch
      %23 = sbr.rel target = $region3
    $region8: #{tpu_custom_call.1} parent=1 // loop_exit
      _
    %566 = vsyncpa [#allocation4], 1
    %s567 = scalar_lea.sflag [#allocation4], 1
    %568 = vsyncpa %s567, 1
    %569 = vsyncpa [#allocation7], 1
    %s570 = scalar_lea.sflag [#allocation7], 1
    %571 = vsyncpa %s570, 1
    %572 = vsyncpa [#allocation10], 1
    %s573 = scalar_lea.sflag [#allocation10], 1
    %574 = vsyncpa %s573, 1
    %575 = vsyncpa [#allocation5], 1
    %s576 = scalar_lea.sflag [#allocation5], 1
    %577 = vsyncpa %s576, 1

</llo_original>
